<compile_context>
chip_gen: v6e
topology: v6e:2x2x1
jax: 0.10.0
libtpu: 0.0.40
codegen_flags: <defaults>
</compile_context>

<pallas_src>
import functools

import jax
import jax.numpy as jnp
from jax.experimental import pallas as pl
from jax.experimental.pallas import tpu as pltpu


def _positize_kernel(x_ref, o_ref, *, bit_size, es_size):
    n = int(bit_size)
    es = int(es_size)
    frac_bits_max = n - 1 - es            # fraction bits with the shortest regime
    max_e = (n - 2) * (1 << es)           # exponent of maxpos
    if max_e <= 126:
        maxpos_bits = (127 + max_e) << 23
        minpos_bits = (127 - max_e) << 23
    else:
        # TODO(synk): posit dynamic range wider than f32 (very large bit_size /
        # es_size); clamp at the f32 normal range instead of true maxpos/minpos.
        maxpos_bits = 0x7F7FFFFF
        minpos_bits = 0x00800000

    x = x_ref[...]
    xf = x if x.dtype == jnp.float32 else x.astype(jnp.float32)
    bits = jax.lax.bitcast_convert_type(xf, jnp.int32)
    abs_bits = bits & jnp.int32(0x7FFFFFFF)
    sign_bits = bits & jnp.int32(-2 ** 31)
    is_zero = abs_bits == 0

    E = (abs_bits >> 23) - 127            # unbiased IEEE exponent
    # TODO(synk): subnormal inputs (E == -127) take the Path-B route and end up
    # clamped to minpos, which is correct for all supported configs.
    if es == 0:
        k = E                             # regime value (useed = 2)
    else:
        k = E >> es                       # floor(E / 2^es) via arithmetic shift
    regime_len = jnp.maximum(k + 2, 1 - k)
    drop = regime_len + (23 - frac_bits_max)   # = 23 - fs (fraction bits to drop)

    # ---- Path A (fs >= 0): round the f32 mantissa to fs bits in-place -------
    # A mantissa carry to 2.0 spills into the exponent field automatically.
    if frac_bits_max <= 23:
        d = jnp.minimum(drop, 23)         # drop >= 2 always holds (bit_size <= 24)
    else:
        d = jnp.clip(drop, 1, 23)         # TODO(synk): wide-posit configs only
    half = jnp.int32(1) << (d - 1)
    val_a_bits = (abs_bits + half) & (jnp.int32(-1) << d)
    # TODO(synk): rounding is half-away-from-zero on the magnitude; the exact
    # tie policy of the reference floatTensor_to_positTensor is unknown.

    # ---- Path B (fs < 0): exponent field itself is quantized -----------------
    # Representable magnitudes are 2^(k*2^es + e_q) with e_q a multiple of 2^sh;
    # pick the nearer of the two bracketing powers (arithmetic midpoint).
    sh = jnp.minimum(drop - 23, 30)       # cap keeps shifts defined; out-of-range
    if es == 0:                           # lanes are covered by the final clamp
        lo_exp = E
    else:
        lo_exp = E & (jnp.int32(-1) << jnp.minimum(sh, es))
    lo_exp = jnp.clip(lo_exp, -126, 127)
    hi_exp = lo_exp + (jnp.int32(1) << sh)
    lo_bits = (lo_exp + 127) << 23                        # exact 2^lo_exp
    hi_bits = (jnp.minimum(hi_exp, 127) + 127) << 23      # exact 2^min(hi,127)
    v_lo = jax.lax.bitcast_convert_type(lo_bits, jnp.float32)
    v_hi = jax.lax.bitcast_convert_type(hi_bits, jnp.float32)
    a = jax.lax.bitcast_convert_type(abs_bits, jnp.float32)
    mid = 0.5 * (v_lo + v_hi)
    val_b_bits = jnp.where(a >= mid, hi_bits, lo_bits)

    # ---- Combine, clamp (bit domain), restore sign ---------------------------
    val_bits = jnp.where(drop <= 23, val_a_bits, val_b_bits)
    val_bits = jnp.clip(val_bits, jnp.int32(minpos_bits), jnp.int32(maxpos_bits))
    # TODO(synk): inf/NaN inputs clamp to +/-maxpos; posit NaR behavior of the
    # original reference is unspecified.
    y_bits = jnp.where(is_zero, jnp.int32(0), val_bits | sign_bits)
    y = jax.lax.bitcast_convert_type(y_bits, jnp.float32)
    # TODO(synk): for bf16/f16 I/O the posit value is re-rounded to the storage
    # dtype here (double rounding).
    o_ref[...] = y.astype(o_ref.dtype)


def _round_up(v, m):
    return -(-v // m) * m


def positize_pallas(x, bit_size, es_size):
    """Elementwise posit(bit_size, es_size) quantization of a float tensor."""
    orig_shape = x.shape
    orig_dtype = x.dtype
    flat = x.reshape(-1)
    total = flat.shape[0]
    if total == 0:
        return x

    kernel = functools.partial(_positize_kernel, bit_size=bit_size, es_size=es_size)
    # 32 MiB scoped VMEM: raises v5e's 16 MiB default, within v7x's 64 MiB.
    cparams = pltpu.CompilerParams(
        dimension_semantics=("parallel",),
        vmem_limit_bytes=32 * 1024 * 1024,
    )
    # TODO(synk): on v7x verify both TensorCores are busy; if not, switch the
    # grid axis to pltpu.CORE_PARALLEL.

    itemsize = jnp.dtype(orig_dtype).itemsize
    sub_mult = max(8, 32 // max(itemsize, 1))       # sublane multiple for I/O dtype
    max_block_elems = 256 * 1024                    # ~1 MiB f32 per block
    min_steps = 4                                   # keep DMA pipelined; v7x cores

    if total % 128 == 0:
        # Lane-dense 2-D layout; widest "nice" lane count dividing the total.
        lanes = 128
        for cand in (1024, 512, 256, 128):
            if total % cand == 0:
                lanes = cand
                break
        rows = total // lanes
        x2 = flat.reshape(rows, lanes)

        cap_rows = max(sub_mult, (max_block_elems // lanes) // sub_mult * sub_mult)
        if rows <= sub_mult:
            block_rows = rows                       # full extent (layout-legal)
        else:
            tgt = _round_up(pl.cdiv(rows, min_steps), sub_mult)
            block_rows = int(max(sub_mult, min(cap_rows, tgt)))
        grid = (pl.cdiv(rows, block_rows),)
        block = (block_rows, lanes)
        out_shape2 = (rows, lanes)
    else:
        # Ragged element count: single-row, lane-blocked layout; Pallas masks
        # the ragged tail block (no jnp.pad / output slice HBM passes).
        x2 = flat.reshape(1, total)
        blk = max(128, min(64 * 1024, _round_up(pl.cdiv(total, min_steps), 128)))
        grid = (pl.cdiv(total, blk),)
        block = (1, blk)
        out_shape2 = (1, total)

    out = pl.pallas_call(
        kernel,
        out_shape=jax.ShapeDtypeStruct(out_shape2, orig_dtype),
        grid=grid,
        in_specs=[pl.BlockSpec(block, lambda i: (i, 0) if block[0] != 1 else (0, i))]
        if False else [pl.BlockSpec(block, (lambda i: (i, 0)) if out_shape2[0] != 1 else (lambda i: (0, i)))],
        out_specs=pl.BlockSpec(block, (lambda i: (i, 0)) if out_shape2[0] != 1 else (lambda i: (0, i))),
        compiler_params=cparams,
    )(x2)

    return out.reshape(-1).reshape(orig_shape)


class PositizeJax:
    """JAX counterpart of the PyTorch Positize module (forward only)."""

    def __init__(self, bit_size, es_size):
        self.bit_size = bit_size
        self.es_size = es_size

    def __call__(self, x):
        return positize_pallas(x, self.bit_size, self.es_size)


if __name__ == "__main__":
    key = jax.random.PRNGKey(0)
    # Small NCHW-like activation tensor, scaled to exercise several regimes.
    x = 4.0 * jax.random.normal(key, (2, 4, 16, 16), dtype=jnp.float32)

    module = PositizeJax(bit_size=8, es_size=1)
    y = jax.block_until_ready(module(x))

    assert y.shape == x.shape and y.dtype == x.dtype
    assert bool(jnp.all(jnp.isfinite(y)))
    # Posit range sanity: nonzero outputs stay inside [minpos, maxpos].
    maxpos = 2.0 ** ((8 - 2) * 2)
    minpos = 1.0 / maxpos
    mag = jnp.abs(y)
    assert bool(jnp.all((mag == 0.0) | ((mag >= minpos) & (mag <= maxpos))))
    # Sign preservation for nonzero inputs.
    assert bool(jnp.all(jnp.where(x != 0.0, jnp.sign(y) == jnp.sign(x), True)))
    # Rounding onto the representable posit set must be idempotent.
    y2 = jax.block_until_ready(module(y))
    assert bool(jnp.all(y2 == y))
    print("KERNEL_OK")
</pallas_src>

<mosaic_0001>
module attributes {stable_mosaic.version = 11 : i64} {
  func.func @_positize_kernel(%arg0: i32, %arg1: memref<2x1024xf32, #tpu.memory_space<vmem>>, %arg2: memref<2x1024xf32, #tpu.memory_space<vmem>>) attributes {dimension_semantics = [#tpu.dimension_semantics<parallel>], iteration_bounds = array<i64: 1>, scalar_prefetch = 0 : i64, scratch_operands = 0 : i64, tpu.core_type = #tpu.core_type<tc>, window_params = [{transform_indices = @transform_0, window_bounds = array<i64: 2, 1024>}, {transform_indices = @transform_1, window_bounds = array<i64: 2, 1024>}]} {
    %c0 = arith.constant 0 : index
    %c0_0 = arith.constant 0 : index
    %0 = vector.load %arg1[%c0, %c0_0] : memref<2x1024xf32, #tpu.memory_space<vmem>>, vector<2x1024xf32>
    %1 = tpu.bitcast %0 : vector<2x1024xf32> -> vector<2x1024xi32>
    %c2147483647_i32 = arith.constant 2147483647 : i32
    %2 = vector.broadcast %c2147483647_i32 : i32 to vector<2x1024xi32>
    %3 = arith.andi %1, %2 : vector<2x1024xi32>
    %c-2147483648_i32 = arith.constant -2147483648 : i32
    %4 = vector.broadcast %c-2147483648_i32 : i32 to vector<2x1024xi32>
    %5 = arith.andi %1, %4 : vector<2x1024xi32>
    %c0_i32 = arith.constant 0 : i32
    %6 = vector.broadcast %c0_i32 : i32 to vector<2x1024xi32>
    %7 = arith.cmpi eq, %3, %6 : vector<2x1024xi32>
    %c23_i32 = arith.constant 23 : i32
    %8 = vector.broadcast %c23_i32 : i32 to vector<2x1024xi32>
    %9 = arith.shrsi %3, %8 : vector<2x1024xi32>
    %c127_i32 = arith.constant 127 : i32
    %10 = vector.broadcast %c127_i32 : i32 to vector<2x1024xi32>
    %11 = arith.subi %9, %10 : vector<2x1024xi32>
    %c1_i32 = arith.constant 1 : i32
    %12 = vector.broadcast %c1_i32 : i32 to vector<2x1024xi32>
    %13 = arith.shrsi %11, %12 : vector<2x1024xi32>
    %c2_i32 = arith.constant 2 : i32
    %14 = vector.broadcast %c2_i32 : i32 to vector<2x1024xi32>
    %15 = arith.addi %13, %14 : vector<2x1024xi32>
    %c1_i32_1 = arith.constant 1 : i32
    %16 = vector.broadcast %c1_i32_1 : i32 to vector<2x1024xi32>
    %17 = arith.subi %16, %13 : vector<2x1024xi32>
    %18 = arith.maxsi %15, %17 : vector<2x1024xi32>
    %c17_i32 = arith.constant 17 : i32
    %19 = vector.broadcast %c17_i32 : i32 to vector<2x1024xi32>
    %20 = arith.addi %18, %19 : vector<2x1024xi32>
    %c23_i32_2 = arith.constant 23 : i32
    %21 = vector.broadcast %c23_i32_2 : i32 to vector<2x1024xi32>
    %22 = arith.minsi %20, %21 : vector<2x1024xi32>
    %c1_i32_3 = arith.constant 1 : i32
    %23 = vector.broadcast %c1_i32_3 : i32 to vector<2x1024xi32>
    %24 = arith.subi %22, %23 : vector<2x1024xi32>
    %c1_i32_4 = arith.constant 1 : i32
    %25 = vector.broadcast %c1_i32_4 : i32 to vector<2x1024xi32>
    %26 = arith.shli %25, %24 : vector<2x1024xi32>
    %27 = arith.addi %3, %26 : vector<2x1024xi32>
    %c-1_i32 = arith.constant -1 : i32
    %28 = vector.broadcast %c-1_i32 : i32 to vector<2x1024xi32>
    %29 = arith.shli %28, %22 : vector<2x1024xi32>
    %30 = arith.andi %27, %29 : vector<2x1024xi32>
    %c23_i32_5 = arith.constant 23 : i32
    %31 = vector.broadcast %c23_i32_5 : i32 to vector<2x1024xi32>
    %32 = arith.subi %20, %31 : vector<2x1024xi32>
    %c30_i32 = arith.constant 30 : i32
    %33 = vector.broadcast %c30_i32 : i32 to vector<2x1024xi32>
    %34 = arith.minsi %32, %33 : vector<2x1024xi32>
    %c1_i32_6 = arith.constant 1 : i32
    %35 = vector.broadcast %c1_i32_6 : i32 to vector<2x1024xi32>
    %36 = arith.minsi %34, %35 : vector<2x1024xi32>
    %c-1_i32_7 = arith.constant -1 : i32
    %37 = vector.broadcast %c-1_i32_7 : i32 to vector<2x1024xi32>
    %38 = arith.shli %37, %36 : vector<2x1024xi32>
    %39 = arith.andi %11, %38 : vector<2x1024xi32>
    %c-126_i32 = arith.constant -126 : i32
    %c127_i32_8 = arith.constant 127 : i32
    %40 = vector.broadcast %c-126_i32 : i32 to vector<2x1024xi32>
    %41 = arith.maxsi %40, %39 : vector<2x1024xi32>
    %42 = vector.broadcast %c127_i32_8 : i32 to vector<2x1024xi32>
    %43 = arith.minsi %42, %41 : vector<2x1024xi32>
    %c1_i32_9 = arith.constant 1 : i32
    %44 = vector.broadcast %c1_i32_9 : i32 to vector<2x1024xi32>
    %45 = arith.shli %44, %34 : vector<2x1024xi32>
    %46 = arith.addi %43, %45 : vector<2x1024xi32>
    %c127_i32_10 = arith.constant 127 : i32
    %47 = vector.broadcast %c127_i32_10 : i32 to vector<2x1024xi32>
    %48 = arith.addi %43, %47 : vector<2x1024xi32>
    %c23_i32_11 = arith.constant 23 : i32
    %49 = vector.broadcast %c23_i32_11 : i32 to vector<2x1024xi32>
    %50 = arith.shli %48, %49 : vector<2x1024xi32>
    %c127_i32_12 = arith.constant 127 : i32
    %51 = vector.broadcast %c127_i32_12 : i32 to vector<2x1024xi32>
    %52 = arith.minsi %46, %51 : vector<2x1024xi32>
    %c127_i32_13 = arith.constant 127 : i32
    %53 = vector.broadcast %c127_i32_13 : i32 to vector<2x1024xi32>
    %54 = arith.addi %52, %53 : vector<2x1024xi32>
    %c23_i32_14 = arith.constant 23 : i32
    %55 = vector.broadcast %c23_i32_14 : i32 to vector<2x1024xi32>
    %56 = arith.shli %54, %55 : vector<2x1024xi32>
    %57 = tpu.bitcast %50 : vector<2x1024xi32> -> vector<2x1024xf32>
    %58 = tpu.bitcast %56 : vector<2x1024xi32> -> vector<2x1024xf32>
    %59 = tpu.bitcast %3 : vector<2x1024xi32> -> vector<2x1024xf32>
    %60 = arith.addf %57, %58 : vector<2x1024xf32>
    %cst = arith.constant 5.000000e-01 : f32
    %61 = vector.broadcast %cst : f32 to vector<2x1024xf32>
    %62 = arith.mulf %61, %60 : vector<2x1024xf32>
    %63 = arith.cmpf oge, %59, %62 : vector<2x1024xf32>
    %64 = arith.select %63, %56, %50 : vector<2x1024xi1>, vector<2x1024xi32>
    %c23_i32_15 = arith.constant 23 : i32
    %65 = vector.broadcast %c23_i32_15 : i32 to vector<2x1024xi32>
    %66 = arith.cmpi sle, %20, %65 : vector<2x1024xi32>
    %67 = arith.select %66, %30, %64 : vector<2x1024xi1>, vector<2x1024xi32>
    %c964689920_i32 = arith.constant 964689920 : i32
    %c1166016512_i32 = arith.constant 1166016512 : i32
    %68 = vector.broadcast %c964689920_i32 : i32 to vector<2x1024xi32>
    %69 = arith.maxsi %68, %67 : vector<2x1024xi32>
    %70 = vector.broadcast %c1166016512_i32 : i32 to vector<2x1024xi32>
    %71 = arith.minsi %70, %69 : vector<2x1024xi32>
    %72 = arith.ori %71, %5 : vector<2x1024xi32>
    %c0_i32_16 = arith.constant 0 : i32
    %73 = vector.broadcast %c0_i32_16 : i32 to vector<2x1024xi32>
    %74 = arith.select %7, %73, %72 : vector<2x1024xi1>, vector<2x1024xi32>
    %75 = tpu.bitcast %74 : vector<2x1024xi32> -> vector<2x1024xf32>
    %c0_17 = arith.constant 0 : index
    %c0_18 = arith.constant 0 : index
    %76 = vector.load %arg2[%c0_17, %c0_18] : memref<2x1024xf32, #tpu.memory_space<vmem>>, vector<2x1024xf32>
    tpu.vector_store %arg2[%c0_17, %c0_18], %75 {strides = array<i32>} : memref<2x1024xf32, #tpu.memory_space<vmem>>, vector<2x1024xf32>,
    return
  }
  func.func @transform_0(%arg0: i32) -> (i32, i32) {
    %c0_i32 = arith.constant 0 : i32
    %c0_i32_0 = arith.constant 0 : i32
    return %arg0, %c0_i32 : i32, i32
  }
  func.func @transform_1(%arg0: i32) -> (i32, i32) {
    %c0_i32 = arith.constant 0 : i32
    %c0_i32_0 = arith.constant 0 : i32
    return %arg0, %c0_i32 : i32, i32
  }
}

</mosaic_0001>

<llo_original>
// kernel: tpu_custom_call.1
$region0: #{tpu_custom_call.1}
  #allocation0 [shape = 'u32[]', space=smem, size = 0x4, offset = 0x4, fixed_abs, tag = 'smem constant byte address 0x4 - core index']
  #allocation1 [shape = 'u32[144,128]{1,0:T(1,128)}', space=vmem, size = 0x12000, scoped, tag = 'internal scratch']
  %s0 = inlined_call_operand.hbm [shape: f32[2,1024], index: 0, kind: input, shape index: {}]
  %s1 = inlined_call_operand.hbm [shape: f32[2,1024], index: 1, kind: output, shape index: {}]
  %s2 = sld [smem:[#allocation0]]
  $region18: #{tpu_custom_call.1} parent=0
    _
  %s4 = ssub.s32 1, %s2
  %s5 = scalar_select 0, %s4, %s2
  $region1: #{tpu_custom_call.1} parent=0
    #allocation2 [shape = 'u8[8192]{0}', space=vmem, size = 0x2000, scoped, tag = 'input window, operand 0, single buffered']
    #allocation3 [shape = 's32[1]{0}', space=sflag, size = 0x4, scoped, tag = 'scoped memory for tpu_custom_call.1']
    #allocation4 [shape = 's32[1]{0}', space=sflag, size = 0x4, scoped, tag = 'scoped memory for tpu_custom_call.1']
    #allocation5 [shape = 'u8[8192]{0}', space=vmem, size = 0x2000, scoped, tag = 'output window, operand 0, single buffered']
    %6 = vsyncpa [#allocation3], 0
    %7 = vsyncpa [#allocation4], 0
    // Predicated region
    $region2: #{tpu_custom_call.1} parent=1 // pred_check
      _
    $region3: #{tpu_custom_call.1} parent=1 // pred_check_branch
      %9 = sbr.rel (0) target = $region5
    $region4: #{tpu_custom_call.1} parent=1 // pred_region
      %s11 = ssub.s32 256, 256
      %12 = vsyncadd [#allocation3], %s11
      %s14 = sshll.u32 [#allocation2], 4
      %s15 = int_to_ptr.vmem [resolvable:$true] %s14
      %17 = dma.hbm_to_vmem [thread:$0]  %s0, 256, %s15, [#allocation3]
    $region5: #{tpu_custom_call.1} parent=1 // pred_fallthru
      _
    // Predicated region
    $region6: #{tpu_custom_call.1} parent=1 // pred_check
      _
    $region7: #{tpu_custom_call.1} parent=1 // pred_check_branch
      %19 = sbr.rel (0) target = $region9
    $region8: #{tpu_custom_call.1} parent=1 // pred_region
      %20 = dma.done [#allocation3], 256
    $region9: #{tpu_custom_call.1} parent=1 // pred_fallthru
      _
    %v21 = vld [vmem:[#allocation2] sm:$0xff]
    %v22 = vld [vmem:[#allocation2 + $0x8] sm:$0xff]
    %v25 = vcombine.high %v21, %v21
    %v27 = vunpack.c.l.s4 1983009808
    %v28 = vunpack.c.0.s8 %v27
    %v29 = vlaneseq
    %v30 = vshrl.u32 %v29, 7
    %v31 = vsub.s32 %v28, %v30
    %v32 = vrot.slane %v21, %v31
    %v34 = vunpack.c.l.s4 1983009808
    %v35 = vunpack.c.0.s8 %v34
    %v36 = vlaneseq
    %v37 = vshrl.u32 %v36, 7
    %v38 = vsub.s32 %v35, %v37
    %v39 = vrot.slane %v25, %v38
    %v40 = vcombine.high %v32, %v32
    %v41 = vcombine.high %v39, %v39
    %v42 = vcombine.high %v22, %v22
    %v44 = vunpack.c.l.s4 1983009808
    %v45 = vunpack.c.0.s8 %v44
    %v46 = vlaneseq
    %v47 = vshrl.u32 %v46, 7
    %v48 = vsub.s32 %v45, %v47
    %v49 = vrot.slane %v22, %v48
    %v51 = vunpack.c.l.s4 1983009808
    %v52 = vunpack.c.0.s8 %v51
    %v53 = vlaneseq
    %v54 = vshrl.u32 %v53, 7
    %v55 = vsub.s32 %v52, %v54
    %v56 = vrot.slane %v42, %v55
    %v57 = vcombine.high %v49, %v49
    %v58 = vcombine.high %v56, %v56
    %v59 = vand.u32 %v32, 2147483647
    %v60 = vand.u32 %v40, 2147483647
    %v61 = vand.u32 %v39, 2147483647
    %v62 = vand.u32 %v41, 2147483647
    %v63 = vand.u32 %v49, 2147483647
    %v64 = vand.u32 %v57, 2147483647
    %v65 = vand.u32 %v56, 2147483647
    %v66 = vand.u32 %v58, 2147483647
    %v67 = vand.u32 %v32, 2147483648
    %v68 = vand.u32 %v40, 2147483648
    %v69 = vand.u32 %v39, 2147483648
    %v70 = vand.u32 %v41, 2147483648
    %v71 = vand.u32 %v49, 2147483648
    %v72 = vand.u32 %v57, 2147483648
    %v73 = vand.u32 %v56, 2147483648
    %v74 = vand.u32 %v58, 2147483648
    %vm75 = vcmp.eq.s32.totalorder %v59, 0
    %vm76 = vcmp.eq.s32.totalorder %v60, 0
    %vm77 = vcmp.eq.s32.totalorder %v61, 0
    %vm78 = vcmp.eq.s32.totalorder %v62, 0
    %vm79 = vcmp.eq.s32.totalorder %v63, 0
    %vm80 = vcmp.eq.s32.totalorder %v64, 0
    %vm81 = vcmp.eq.s32.totalorder %v65, 0
    %vm82 = vcmp.eq.s32.totalorder %v66, 0
    %v83 = vshra.s32 %v59, 23
    %v84 = vshra.s32 %v60, 23
    %v85 = vshra.s32 %v61, 23
    %v86 = vshra.s32 %v62, 23
    %v87 = vshra.s32 %v63, 23
    %v88 = vshra.s32 %v64, 23
    %v89 = vshra.s32 %v65, 23
    %v90 = vshra.s32 %v66, 23
    %v91 = vsub.s32 %v83, 127
    %v92 = vsub.s32 %v84, 127
    %v93 = vsub.s32 %v85, 127
    %v94 = vsub.s32 %v86, 127
    %v95 = vsub.s32 %v87, 127
    %v96 = vsub.s32 %v88, 127
    %v97 = vsub.s32 %v89, 127
    %v98 = vsub.s32 %v90, 127
    %v99 = vshra.s32 %v91, 1
    %v100 = vshra.s32 %v92, 1
    %v101 = vshra.s32 %v93, 1
    %v102 = vshra.s32 %v94, 1
    %v103 = vshra.s32 %v95, 1
    %v104 = vshra.s32 %v96, 1
    %v105 = vshra.s32 %v97, 1
    %v106 = vshra.s32 %v98, 1
    %v107 = vadd.s32 %v99, 2
    %v108 = vadd.s32 %v100, 2
    %v109 = vadd.s32 %v101, 2
    %v110 = vadd.s32 %v102, 2
    %v111 = vadd.s32 %v103, 2
    %v112 = vadd.s32 %v104, 2
    %v113 = vadd.s32 %v105, 2
    %v114 = vadd.s32 %v106, 2
    %v115 = vsub.s32 1, %v99
    %v116 = vsub.s32 1, %v100
    %v117 = vsub.s32 1, %v101
    %v118 = vsub.s32 1, %v102
    %v119 = vsub.s32 1, %v103
    %v120 = vsub.s32 1, %v104
    %v121 = vsub.s32 1, %v105
    %v122 = vsub.s32 1, %v106
    %vm123 = vcmp.gt.s32.totalorder %v107, %v115
    %v124 = vsel %vm123, %v107, %v115
    %vm125 = vcmp.gt.s32.totalorder %v108, %v116
    %v126 = vsel %vm125, %v108, %v116
    %vm127 = vcmp.gt.s32.totalorder %v109, %v117
    %v128 = vsel %vm127, %v109, %v117
    %vm129 = vcmp.gt.s32.totalorder %v110, %v118
    %v130 = vsel %vm129, %v110, %v118
    %vm131 = vcmp.gt.s32.totalorder %v111, %v119
    %v132 = vsel %vm131, %v111, %v119
    %vm133 = vcmp.gt.s32.totalorder %v112, %v120
    %v134 = vsel %vm133, %v112, %v120
    %vm135 = vcmp.gt.s32.totalorder %v113, %v121
    %v136 = vsel %vm135, %v113, %v121
    %vm137 = vcmp.gt.s32.totalorder %v114, %v122
    %v138 = vsel %vm137, %v114, %v122
    %v139 = vadd.s32 %v124, 17
    %v140 = vadd.s32 %v126, 17
    %v141 = vadd.s32 %v128, 17
    %v142 = vadd.s32 %v130, 17
    %v143 = vadd.s32 %v132, 17
    %v144 = vadd.s32 %v134, 17
    %v145 = vadd.s32 %v136, 17
    %v146 = vadd.s32 %v138, 17
    %vm147 = vcmp.lt.s32.totalorder %v139, 23
    %v148 = vsel %vm147, %v139, 23
    %vm149 = vcmp.lt.s32.totalorder %v140, 23
    %v150 = vsel %vm149, %v140, 23
    %vm151 = vcmp.lt.s32.totalorder %v141, 23
    %v152 = vsel %vm151, %v141, 23
    %vm153 = vcmp.lt.s32.totalorder %v142, 23
    %v154 = vsel %vm153, %v142, 23
    %vm155 = vcmp.lt.s32.totalorder %v143, 23
    %v156 = vsel %vm155, %v143, 23
    %vm157 = vcmp.lt.s32.totalorder %v144, 23
    %v158 = vsel %vm157, %v144, 23
    %vm159 = vcmp.lt.s32.totalorder %v145, 23
    %v160 = vsel %vm159, %v145, 23
    %vm161 = vcmp.lt.s32.totalorder %v146, 23
    %v162 = vsel %vm161, %v146, 23
    %v163 = vsub.s32 %v148, 1
    %v164 = vsub.s32 %v150, 1
    %v165 = vsub.s32 %v152, 1
    %v166 = vsub.s32 %v154, 1
    %v167 = vsub.s32 %v156, 1
    %v168 = vsub.s32 %v158, 1
    %v169 = vsub.s32 %v160, 1
    %v170 = vsub.s32 %v162, 1
    %v171 = vshll.u32 1, %v163
    %v172 = vshll.u32 1, %v164
    %v173 = vshll.u32 1, %v165
    %v174 = vshll.u32 1, %v166
    %v175 = vshll.u32 1, %v167
    %v176 = vshll.u32 1, %v168
    %v177 = vshll.u32 1, %v169
    %v178 = vshll.u32 1, %v170
    %v179 = vadd.s32 %v59, %v171
    %v180 = vadd.s32 %v60, %v172
    %v181 = vadd.s32 %v61, %v173
    %v182 = vadd.s32 %v62, %v174
    %v183 = vadd.s32 %v63, %v175
    %v184 = vadd.s32 %v64, %v176
    %v185 = vadd.s32 %v65, %v177
    %v186 = vadd.s32 %v66, %v178
    %v187 = vshll.u32 4294967295, %v148
    %v188 = vshll.u32 4294967295, %v150
    %v189 = vshll.u32 4294967295, %v152
    %v190 = vshll.u32 4294967295, %v154
    %v191 = vshll.u32 4294967295, %v156
    %v192 = vshll.u32 4294967295, %v158
    %v193 = vshll.u32 4294967295, %v160
    %v194 = vshll.u32 4294967295, %v162
    %v195 = vand.u32 %v179, %v187
    %v196 = vand.u32 %v180, %v188
    %v197 = vand.u32 %v181, %v189
    %v198 = vand.u32 %v182, %v190
    %v199 = vand.u32 %v183, %v191
    %v200 = vand.u32 %v184, %v192
    %v201 = vand.u32 %v185, %v193
    %v202 = vand.u32 %v186, %v194
    %v203 = vsub.s32 %v139, 23
    %v204 = vsub.s32 %v140, 23
    %v205 = vsub.s32 %v141, 23
    %v206 = vsub.s32 %v142, 23
    %v207 = vsub.s32 %v143, 23
    %v208 = vsub.s32 %v144, 23
    %v209 = vsub.s32 %v145, 23
    %v210 = vsub.s32 %v146, 23
    %vm211 = vcmp.lt.s32.totalorder %v203, 30
    %v212 = vsel %vm211, %v203, 30
    %vm213 = vcmp.lt.s32.totalorder %v204, 30
    %v214 = vsel %vm213, %v204, 30
    %vm215 = vcmp.lt.s32.totalorder %v205, 30
    %v216 = vsel %vm215, %v205, 30
    %vm217 = vcmp.lt.s32.totalorder %v206, 30
    %v218 = vsel %vm217, %v206, 30
    %vm219 = vcmp.lt.s32.totalorder %v207, 30
    %v220 = vsel %vm219, %v207, 30
    %vm221 = vcmp.lt.s32.totalorder %v208, 30
    %v222 = vsel %vm221, %v208, 30
    %vm223 = vcmp.lt.s32.totalorder %v209, 30
    %v224 = vsel %vm223, %v209, 30
    %vm225 = vcmp.lt.s32.totalorder %v210, 30
    %v226 = vsel %vm225, %v210, 30
    %vm227 = vcmp.lt.s32.totalorder %v212, 1
    %v228 = vsel %vm227, %v212, 1
    %vm229 = vcmp.lt.s32.totalorder %v214, 1
    %v230 = vsel %vm229, %v214, 1
    %vm231 = vcmp.lt.s32.totalorder %v216, 1
    %v232 = vsel %vm231, %v216, 1
    %vm233 = vcmp.lt.s32.totalorder %v218, 1
    %v234 = vsel %vm233, %v218, 1
    %vm235 = vcmp.lt.s32.totalorder %v220, 1
    %v236 = vsel %vm235, %v220, 1
    %vm237 = vcmp.lt.s32.totalorder %v222, 1
    %v238 = vsel %vm237, %v222, 1
    %vm239 = vcmp.lt.s32.totalorder %v224, 1
    %v240 = vsel %vm239, %v224, 1
    %vm241 = vcmp.lt.s32.totalorder %v226, 1
    %v242 = vsel %vm241, %v226, 1
    %v243 = vshll.u32 4294967295, %v228
    %v244 = vshll.u32 4294967295, %v230
    %v245 = vshll.u32 4294967295, %v232
    %v246 = vshll.u32 4294967295, %v234
    %v247 = vshll.u32 4294967295, %v236
    %v248 = vshll.u32 4294967295, %v238
    %v249 = vshll.u32 4294967295, %v240
    %v250 = vshll.u32 4294967295, %v242
    %v251 = vand.u32 %v91, %v243
    %v252 = vand.u32 %v92, %v244
    %v253 = vand.u32 %v93, %v245
    %v254 = vand.u32 %v94, %v246
    %v255 = vand.u32 %v95, %v247
    %v256 = vand.u32 %v96, %v248
    %v257 = vand.u32 %v97, %v249
    %v258 = vand.u32 %v98, %v250
    %vm259 = vcmp.gt.s32.totalorder %v251, 4294967170
    %v260 = vsel %vm259, %v251, 4294967170
    %vm261 = vcmp.gt.s32.totalorder %v252, 4294967170
    %v262 = vsel %vm261, %v252, 4294967170
    %vm263 = vcmp.gt.s32.totalorder %v253, 4294967170
    %v264 = vsel %vm263, %v253, 4294967170
    %vm265 = vcmp.gt.s32.totalorder %v254, 4294967170
    %v266 = vsel %vm265, %v254, 4294967170
    %vm267 = vcmp.gt.s32.totalorder %v255, 4294967170
    %v268 = vsel %vm267, %v255, 4294967170
    %vm269 = vcmp.gt.s32.totalorder %v256, 4294967170
    %v270 = vsel %vm269, %v256, 4294967170
    %vm271 = vcmp.gt.s32.totalorder %v257, 4294967170
    %v272 = vsel %vm271, %v257, 4294967170
    %vm273 = vcmp.gt.s32.totalorder %v258, 4294967170
    %v274 = vsel %vm273, %v258, 4294967170
    %vm275 = vcmp.lt.s32.totalorder %v260, 127
    %v276 = vsel %vm275, %v260, 127
    %vm277 = vcmp.lt.s32.totalorder %v262, 127
    %v278 = vsel %vm277, %v262, 127
    %vm279 = vcmp.lt.s32.totalorder %v264, 127
    %v280 = vsel %vm279, %v264, 127
    %vm281 = vcmp.lt.s32.totalorder %v266, 127
    %v282 = vsel %vm281, %v266, 127
    %vm283 = vcmp.lt.s32.totalorder %v268, 127
    %v284 = vsel %vm283, %v268, 127
    %vm285 = vcmp.lt.s32.totalorder %v270, 127
    %v286 = vsel %vm285, %v270, 127
    %vm287 = vcmp.lt.s32.totalorder %v272, 127
    %v288 = vsel %vm287, %v272, 127
    %vm289 = vcmp.lt.s32.totalorder %v274, 127
    %v290 = vsel %vm289, %v274, 127
    %v291 = vshll.u32 1, %v212
    %v292 = vshll.u32 1, %v214
    %v293 = vshll.u32 1, %v216
    %v294 = vshll.u32 1, %v218
    %v295 = vshll.u32 1, %v220
    %v296 = vshll.u32 1, %v222
    %v297 = vshll.u32 1, %v224
    %v298 = vshll.u32 1, %v226
    %v299 = vadd.s32 %v276, %v291
    %v300 = vadd.s32 %v278, %v292
    %v301 = vadd.s32 %v280, %v293
    %v302 = vadd.s32 %v282, %v294
    %v303 = vadd.s32 %v284, %v295
    %v304 = vadd.s32 %v286, %v296
    %v305 = vadd.s32 %v288, %v297
    %v306 = vadd.s32 %v290, %v298
    %v307 = vadd.s32 %v276, 127
    %v308 = vadd.s32 %v278, 127
    %v309 = vadd.s32 %v280, 127
    %v310 = vadd.s32 %v282, 127
    %v311 = vadd.s32 %v284, 127
    %v312 = vadd.s32 %v286, 127
    %v313 = vadd.s32 %v288, 127
    %v314 = vadd.s32 %v290, 127
    %v315 = vshll.u32 %v307, 23
    %v316 = vshll.u32 %v308, 23
    %v317 = vshll.u32 %v309, 23
    %v318 = vshll.u32 %v310, 23
    %v319 = vshll.u32 %v311, 23
    %v320 = vshll.u32 %v312, 23
    %v321 = vshll.u32 %v313, 23
    %v322 = vshll.u32 %v314, 23
    %vm323 = vcmp.lt.s32.totalorder %v299, 127
    %v324 = vsel %vm323, %v299, 127
    %vm325 = vcmp.lt.s32.totalorder %v300, 127
    %v326 = vsel %vm325, %v300, 127
    %vm327 = vcmp.lt.s32.totalorder %v301, 127
    %v328 = vsel %vm327, %v301, 127
    %vm329 = vcmp.lt.s32.totalorder %v302, 127
    %v330 = vsel %vm329, %v302, 127
    %vm331 = vcmp.lt.s32.totalorder %v303, 127
    %v332 = vsel %vm331, %v303, 127
    %vm333 = vcmp.lt.s32.totalorder %v304, 127
    %v334 = vsel %vm333, %v304, 127
    %vm335 = vcmp.lt.s32.totalorder %v305, 127
    %v336 = vsel %vm335, %v305, 127
    %vm337 = vcmp.lt.s32.totalorder %v306, 127
    %v338 = vsel %vm337, %v306, 127
    %v339 = vadd.s32 %v324, 127
    %v340 = vadd.s32 %v326, 127
    %v341 = vadd.s32 %v328, 127
    %v342 = vadd.s32 %v330, 127
    %v343 = vadd.s32 %v332, 127
    %v344 = vadd.s32 %v334, 127
    %v345 = vadd.s32 %v336, 127
    %v346 = vadd.s32 %v338, 127
    %v347 = vshll.u32 %v339, 23
    %v348 = vshll.u32 %v340, 23
    %v349 = vshll.u32 %v341, 23
    %v350 = vshll.u32 %v342, 23
    %v351 = vshll.u32 %v343, 23
    %v352 = vshll.u32 %v344, 23
    %v353 = vshll.u32 %v345, 23
    %v354 = vshll.u32 %v346, 23
    %v379 = vadd.f32 %v315, %v347
    %v380 = vadd.f32 %v316, %v348
    %v381 = vadd.f32 %v317, %v349
    %v382 = vadd.f32 %v318, %v350
    %v383 = vadd.f32 %v319, %v351
    %v384 = vadd.f32 %v320, %v352
    %v385 = vadd.f32 %v321, %v353
    %v386 = vadd.f32 %v322, %v354
    %v387 = vmul.f32 %v379, 0.5
    %v388 = vmul.f32 %v380, 0.5
    %v389 = vmul.f32 %v381, 0.5
    %v390 = vmul.f32 %v382, 0.5
    %v391 = vmul.f32 %v383, 0.5
    %v392 = vmul.f32 %v384, 0.5
    %v393 = vmul.f32 %v385, 0.5
    %v394 = vmul.f32 %v386, 0.5
    %vm395 = vcmp.ge.f32.partialorder %v59, %v387
    %vm396 = vcmp.ge.f32.partialorder %v60, %v388
    %vm397 = vcmp.ge.f32.partialorder %v61, %v389
    %vm398 = vcmp.ge.f32.partialorder %v62, %v390
    %vm399 = vcmp.ge.f32.partialorder %v63, %v391
    %vm400 = vcmp.ge.f32.partialorder %v64, %v392
    %vm401 = vcmp.ge.f32.partialorder %v65, %v393
    %vm402 = vcmp.ge.f32.partialorder %v66, %v394
    %v403 = vsel %vm395, %v347, %v315
    %v404 = vsel %vm396, %v348, %v316
    %v405 = vsel %vm397, %v349, %v317
    %v406 = vsel %vm398, %v350, %v318
    %v407 = vsel %vm399, %v351, %v319
    %v408 = vsel %vm400, %v352, %v320
    %v409 = vsel %vm401, %v353, %v321
    %v410 = vsel %vm402, %v354, %v322
    %vm411 = vcmp.le.s32.totalorder %v139, 23
    %vm412 = vcmp.le.s32.totalorder %v140, 23
    %vm413 = vcmp.le.s32.totalorder %v141, 23
    %vm414 = vcmp.le.s32.totalorder %v142, 23
    %vm415 = vcmp.le.s32.totalorder %v143, 23
    %vm416 = vcmp.le.s32.totalorder %v144, 23
    %vm417 = vcmp.le.s32.totalorder %v145, 23
    %vm418 = vcmp.le.s32.totalorder %v146, 23
    %v419 = vsel %vm411, %v195, %v403
    %v420 = vsel %vm412, %v196, %v404
    %v421 = vsel %vm413, %v197, %v405
    %v422 = vsel %vm414, %v198, %v406
    %v423 = vsel %vm415, %v199, %v407
    %v424 = vsel %vm416, %v200, %v408
    %v425 = vsel %vm417, %v201, %v409
    %v426 = vsel %vm418, %v202, %v410
    %vm427 = vcmp.gt.s32.totalorder %v419, 964689920
    %v428 = vsel %vm427, %v419, 964689920
    %vm429 = vcmp.gt.s32.totalorder %v420, 964689920
    %v430 = vsel %vm429, %v420, 964689920
    %vm431 = vcmp.gt.s32.totalorder %v421, 964689920
    %v432 = vsel %vm431, %v421, 964689920
    %vm433 = vcmp.gt.s32.totalorder %v422, 964689920
    %v434 = vsel %vm433, %v422, 964689920
    %vm435 = vcmp.gt.s32.totalorder %v423, 964689920
    %v436 = vsel %vm435, %v423, 964689920
    %vm437 = vcmp.gt.s32.totalorder %v424, 964689920
    %v438 = vsel %vm437, %v424, 964689920
    %vm439 = vcmp.gt.s32.totalorder %v425, 964689920
    %v440 = vsel %vm439, %v425, 964689920
    %vm441 = vcmp.gt.s32.totalorder %v426, 964689920
    %v442 = vsel %vm441, %v426, 964689920
    %vm443 = vcmp.lt.s32.totalorder %v428, 1166016512
    %v444 = vsel %vm443, %v428, 1166016512
    %vm445 = vcmp.lt.s32.totalorder %v430, 1166016512
    %v446 = vsel %vm445, %v430, 1166016512
    %vm447 = vcmp.lt.s32.totalorder %v432, 1166016512
    %v448 = vsel %vm447, %v432, 1166016512
    %vm449 = vcmp.lt.s32.totalorder %v434, 1166016512
    %v450 = vsel %vm449, %v434, 1166016512
    %vm451 = vcmp.lt.s32.totalorder %v436, 1166016512
    %v452 = vsel %vm451, %v436, 1166016512
    %vm453 = vcmp.lt.s32.totalorder %v438, 1166016512
    %v454 = vsel %vm453, %v438, 1166016512
    %vm455 = vcmp.lt.s32.totalorder %v440, 1166016512
    %v456 = vsel %vm455, %v440, 1166016512
    %vm457 = vcmp.lt.s32.totalorder %v442, 1166016512
    %v458 = vsel %vm457, %v442, 1166016512
    %v459 = vor.u32 %v444, %v67
    %v460 = vor.u32 %v446, %v68
    %v461 = vor.u32 %v448, %v69
    %v462 = vor.u32 %v450, %v70
    %v463 = vor.u32 %v452, %v71
    %v464 = vor.u32 %v454, %v72
    %v465 = vor.u32 %v456, %v73
    %v466 = vor.u32 %v458, %v74
    %v467 = vsel %vm75, 0, %v459
    %v468 = vsel %vm76, 0, %v460
    %v469 = vsel %vm77, 0, %v461
    %v470 = vsel %vm78, 0, %v462
    %v471 = vsel %vm79, 0, %v463
    %v472 = vsel %vm80, 0, %v464
    %v473 = vsel %vm81, 0, %v465
    %v474 = vsel %vm82, 0, %v466
    %v475 = vcombine.low %v467, %v468
    %v476 = vcombine.low %v469, %v470
    %v478 = vunpack.c.l.s4 1983009808
    %v479 = vunpack.c.0.s8 %v478
    %v480 = vlaneseq
    %v481 = vshrl.u32 %v480, 7
    %v482 = vsub.s32 %v479, %v481
    %v483 = vrot.slane %v475, %v482
    %v485 = vunpack.c.l.s4 1983009808
    %v486 = vunpack.c.0.s8 %v485
    %v487 = vlaneseq
    %v488 = vshrl.u32 %v487, 7
    %v489 = vsub.s32 %v486, %v488
    %v490 = vrot.slane %v476, %v489
    %v491 = vcombine.low %v483, %v490
    %v492 = vcombine.low %v471, %v472
    %v493 = vcombine.low %v473, %v474
    %v495 = vunpack.c.l.s4 1983009808
    %v496 = vunpack.c.0.s8 %v495
    %v497 = vlaneseq
    %v498 = vshrl.u32 %v497, 7
    %v499 = vsub.s32 %v496, %v498
    %v500 = vrot.slane %v492, %v499
    %v502 = vunpack.c.l.s4 1983009808
    %v503 = vunpack.c.0.s8 %v502
    %v504 = vlaneseq
    %v505 = vshrl.u32 %v504, 7
    %v506 = vsub.s32 %v503, %v505
    %v507 = vrot.slane %v493, %v506
    %v508 = vcombine.low %v500, %v507
    %511 = vst [vmem:[#allocation5] sm:$0xff] %v491
    %512 = vst [vmem:[#allocation5 + $0x8] sm:$0xff] %v508
    // Predicated region
    $region10: #{tpu_custom_call.1} parent=1 // pred_check
      _
    $region11: #{tpu_custom_call.1} parent=1 // pred_check_branch
      %514 = sbr.rel (0) target = $region13
    $region12: #{tpu_custom_call.1} parent=1 // pred_region
      %s516 = ssub.s32 256, 256
      %517 = vsyncadd [#allocation4], %s516
      %s519 = sshll.u32 [#allocation5], 4
      %s520 = int_to_ptr.vmem [resolvable:$true] %s519
      %522 = dma.vmem_to_hbm [thread:$0]  %s520, 256, %s1, [#allocation4]
    $region13: #{tpu_custom_call.1} parent=1 // pred_fallthru
      _
    // Predicated region
    $region14: #{tpu_custom_call.1} parent=1 // pred_check
      _
    $region15: #{tpu_custom_call.1} parent=1 // pred_check_branch
      %524 = sbr.rel (0) target = $region17
    $region16: #{tpu_custom_call.1} parent=1 // pred_region
      %525 = dma.done [#allocation4], 256
    $region17: #{tpu_custom_call.1} parent=1 // pred_fallthru
      _
    %526 = vsyncpa [#allocation3], 1
    %527 = vsyncpa [#allocation4], 1

</llo_original>
